<compile_context>
chip_gen: v7x
topology: tpu7x:2x2x1
jax: 0.10.0
libtpu: 0.0.40
codegen_flags: <defaults>
</compile_context>

<pallas_src>
import jax
import jax.numpy as jnp
from jax.experimental import pallas as pl
from jax.experimental.pallas import tpu as pltpu

BATCH = 2
SEQ = 16
HIDDEN = 32
NUM_LABELS = 4
VOCAB = 100


def fused_gather_pool_classifier_kernel(ids_ref, mask_bd_ref, emb_tbl_ref,
                                        enc_w_ref, enc_b_ref,
                                        cls_w_ref, cls_b_ref, logits_ref):
    """Single grid step; every ref is a full-array VMEM block.

    ids_ref    : (B*S, 1)   i32  flattened token ids
    mask_bd_ref: (B, B*S)   f32  block-diagonal attention mask
    emb_tbl_ref: (V, H)     f32  embedding table (VMEM resident, 12.8 KB)
    enc_w_ref  : (H, H)     f32  backbone stand-in projection weight
    enc_b_ref  : (1, H)     f32  backbone stand-in projection bias
    cls_w_ref  : (H, L)     f32  classifier weight (transposed vs torch)
    cls_b_ref  : (1, L)     f32  classifier bias
    logits_ref : (B, L)     f32  output logits
    """
    bs = ids_ref.shape[0]
    vocab = emb_tbl_ref.shape[0]

    # Embedding lookup as an exact one-hot matmul on the MXU (no HBM gather).
    vocab_iota = jax.lax.broadcasted_iota(jnp.int32, (bs, vocab), 1)
    onehot = (vocab_iota == ids_ref[...]).astype(jnp.float32)        # (BS, V)
    emb = jnp.dot(onehot, emb_tbl_ref[...],
                  preferred_element_type=jnp.float32)                # (BS, H)

    # Backbone stand-in: tanh(emb @ enc_w + enc_b). MXU matmul + EUP tanh.
    tok = jnp.tanh(
        jnp.dot(emb, enc_w_ref[...], preferred_element_type=jnp.float32)
        + enc_b_ref[...])                                            # (BS, H)

    # Masked sequence sum as a block-diagonal-mask matmul (MXU, no reshapes).
    mask_bd = mask_bd_ref[...]                                       # (B, BS)
    sum_emb = jnp.dot(mask_bd, tok,
                      preferred_element_type=jnp.float32)            # (B, H)
    cnt = jnp.sum(mask_bd, axis=1, keepdims=True)                    # (B, 1)

    # non_pad_tokens.clamp(min=1e-9); exact divide (nothing is EUP-bound here).
    pooled = sum_emb / jnp.maximum(cnt, 1e-9)                        # (B, H)

    # dropout(p=0.1) is identity at inference time; classifier head.
    logits = jnp.dot(pooled, cls_w_ref[...],
                     preferred_element_type=jnp.float32) + cls_b_ref[...]
    logits_ref[...] = logits.astype(logits_ref.dtype)


def pooled_classifier(input_ids, attention_mask, embedding, enc_w, enc_b,
                      cls_w_t, cls_b):
    """Fused (embedding gather -> projection -> masked mean -> classifier)."""
    B, S = input_ids.shape
    V, H = embedding.shape
    L = cls_w_t.shape[1]
    BS = B * S

    ids_2d = input_ids.reshape(BS, 1).astype(jnp.int32)
    mask_f = attention_mask.astype(jnp.float32)
    # Block-diagonal mask (B, B*S): row b holds mask[b] in cols b*S:(b+1)*S.
    mask_bd = (jnp.eye(B, dtype=jnp.float32)[:, :, None]
               * mask_f[None, :, :]).reshape(B, BS)

    return pl.pallas_call(
        fused_gather_pool_classifier_kernel,
        out_shape=jax.ShapeDtypeStruct((B, L), jnp.float32),
        grid_spec=pltpu.PrefetchScalarGridSpec(
            num_scalar_prefetch=0,
            grid=(1,),
            in_specs=[
                pl.BlockSpec((BS, 1), lambda i: (0, 0)),   # ids
                pl.BlockSpec((B, BS), lambda i: (0, 0)),   # block-diag mask
                pl.BlockSpec((V, H), lambda i: (0, 0)),    # embedding table
                pl.BlockSpec((H, H), lambda i: (0, 0)),    # enc_w
                pl.BlockSpec((1, H), lambda i: (0, 0)),    # enc_b
                pl.BlockSpec((H, L), lambda i: (0, 0)),    # cls_w_t
                pl.BlockSpec((1, L), lambda i: (0, 0)),    # cls_b
            ],
            out_specs=pl.BlockSpec((B, L), lambda i: (0, 0)),
        ),
        compiler_params=pltpu.CompilerParams(
            dimension_semantics=("arbitrary",)),
    )(ids_2d, mask_bd,
      embedding.astype(jnp.float32),
      enc_w.astype(jnp.float32),
      enc_b.reshape(1, H).astype(jnp.float32),
      cls_w_t.astype(jnp.float32),
      cls_b.reshape(1, L).astype(jnp.float32))


def custom_model_forward(params, input_ids, attention_mask, labels=None):
    """Mirrors CustomModel.forward. Returns (loss, logits)."""
    logits = pooled_classifier(
        input_ids, attention_mask,
        params["embedding"], params["enc_w"], params["enc_b"],
        params["cls_w_t"], params["cls_b"])

    loss = None
    if labels is not None:
        # nn.CrossEntropyLoss (mean reduction)
        logp = jax.nn.log_softmax(logits, axis=-1)
        loss = -jnp.mean(jnp.take_along_axis(logp, labels[:, None], axis=-1))
    return loss, logits


def reference_forward(params, input_ids, attention_mask):
    """Plain-JAX f32 reference of the same math."""
    emb = params["embedding"][input_ids]                             # (B, S, H)
    tok = jnp.tanh(emb @ params["enc_w"] + params["enc_b"])
    m = attention_mask.astype(jnp.float32)
    denom = jnp.maximum(jnp.sum(m, axis=1, keepdims=True), 1e-9)
    pooled = jnp.sum(tok * m[:, :, None], axis=1) / denom
    return pooled @ params["cls_w_t"] + params["cls_b"]


def make_params(key):
    k_emb, k_enc, k_cls = jax.random.split(key, 3)
    return {
        "embedding": jax.random.normal(k_emb, (VOCAB, HIDDEN), jnp.float32) * 0.02,
        "enc_w": jax.random.normal(k_enc, (HIDDEN, HIDDEN), jnp.float32) * 0.1,
        "enc_b": jnp.zeros((HIDDEN,), jnp.float32),
        # nn.Linear(hidden_size, num_labels): stored transposed as (H, L)
        "cls_w_t": jax.random.normal(k_cls, (HIDDEN, NUM_LABELS), jnp.float32) * 0.1,
        "cls_b": jnp.zeros((NUM_LABELS,), jnp.float32),
    }


if __name__ == "__main__":
    key = jax.random.PRNGKey(0)
    k_params, k_ids, k_labels = jax.random.split(key, 3)
    params = make_params(k_params)

    input_ids = jax.random.randint(k_ids, (BATCH, SEQ), 0, VOCAB, jnp.int32)
    # Deterministic mask: row 0 uses 10 tokens, row 1 uses 5 tokens.
    attention_mask = jnp.array(
        [[1] * 10 + [0] * (SEQ - 10),
         [1] * 5 + [0] * (SEQ - 5)], dtype=jnp.float32)
    labels = jax.random.randint(k_labels, (BATCH,), 0, NUM_LABELS, jnp.int32)

    loss, logits = custom_model_forward(params, input_ids, attention_mask,
                                        labels)
    logits = jax.block_until_ready(logits)
    loss = jax.block_until_ready(loss)

    ref_logits = reference_forward(params, input_ids, attention_mask)

    assert logits.shape == (BATCH, NUM_LABELS)
    assert bool(jnp.all(jnp.isfinite(logits)))
    assert bool(jnp.isfinite(loss))
    assert bool(jnp.allclose(logits, ref_logits, rtol=1e-3, atol=1e-3)), (
        logits, ref_logits)
    print("KERNEL_OK")
</pallas_src>

<mosaic_0001>
module attributes {stable_mosaic.version = 11 : i64} {
  func.func @fused_gather_pool_classifier_kernel(%arg0: i32, %arg1: memref<32x1xi32, #tpu.memory_space<vmem>>, %arg2: memref<2x32xf32, #tpu.memory_space<vmem>>, %arg3: memref<100x32xf32, #tpu.memory_space<vmem>>, %arg4: memref<32x32xf32, #tpu.memory_space<vmem>>, %arg5: memref<1x32xf32, #tpu.memory_space<vmem>>, %arg6: memref<32x4xf32, #tpu.memory_space<vmem>>, %arg7: memref<1x4xf32, #tpu.memory_space<vmem>>, %arg8: memref<2x4xf32, #tpu.memory_space<vmem>>) attributes {dimension_semantics = [#tpu.dimension_semantics<arbitrary>], iteration_bounds = array<i64: 1>, scalar_prefetch = 0 : i64, scratch_operands = 0 : i64, tpu.core_type = #tpu.core_type<tc>, window_params = [{pipeline_mode = #tpu.pipeline_mode<synchronous>, transform_indices = @transform_0, window_bounds = array<i64: 32, 1>}, {pipeline_mode = #tpu.pipeline_mode<synchronous>, transform_indices = @transform_1, window_bounds = array<i64: 2, 32>}, {pipeline_mode = #tpu.pipeline_mode<synchronous>, transform_indices = @transform_2, window_bounds = array<i64: 100, 32>}, {pipeline_mode = #tpu.pipeline_mode<synchronous>, transform_indices = @transform_3, window_bounds = array<i64: 32, 32>}, {pipeline_mode = #tpu.pipeline_mode<synchronous>, transform_indices = @transform_4, window_bounds = array<i64: 1, 32>}, {pipeline_mode = #tpu.pipeline_mode<synchronous>, transform_indices = @transform_5, window_bounds = array<i64: 32, 4>}, {pipeline_mode = #tpu.pipeline_mode<synchronous>, transform_indices = @transform_6, window_bounds = array<i64: 1, 4>}, {pipeline_mode = #tpu.pipeline_mode<synchronous>, transform_indices = @transform_7, window_bounds = array<i64: 2, 4>}]} {
    %0 = tpu.iota {dimensions = array<i32: 1>} : vector<32x100xi32>
    %c0 = arith.constant 0 : index
    %c0_0 = arith.constant 0 : index
    %1 = vector.load %arg1[%c0, %c0_0] : memref<32x1xi32, #tpu.memory_space<vmem>>, vector<32x1xi32>
    %2 = vector.broadcast %1 : vector<32x1xi32> to vector<32x100xi32>
    %3 = arith.cmpi eq, %0, %2 : vector<32x100xi32>
    %4 = arith.extui %3 : vector<32x100xi1> to vector<32x100xi32>
    %5 = arith.sitofp %4 : vector<32x100xi32> to vector<32x100xf32>
    %c0_1 = arith.constant 0 : index
    %c0_2 = arith.constant 0 : index
    %6 = vector.load %arg3[%c0_1, %c0_2] : memref<100x32xf32, #tpu.memory_space<vmem>>, vector<100x32xf32>
    %cst = arith.constant dense<0.000000e+00> : vector<32x32xf32>
    %7 = tpu.matmul %5, %6, %cst {dimension_numbers = #tpu.dot_dimension_numbers<[1], [0], [0], [1], [0, 0, 1, 1], [], []>} : vector<32x100xf32>, vector<100x32xf32>, vector<32x32xf32> -> vector<32x32xf32>
    %c0_3 = arith.constant 0 : index
    %c0_4 = arith.constant 0 : index
    %8 = vector.load %arg4[%c0_3, %c0_4] : memref<32x32xf32, #tpu.memory_space<vmem>>, vector<32x32xf32>
    %cst_5 = arith.constant dense<0.000000e+00> : vector<32x32xf32>
    %9 = tpu.matmul %7, %8, %cst_5 {dimension_numbers = #tpu.dot_dimension_numbers<[1], [0], [0], [1], [0, 0, 1, 1], [], []>} : vector<32x32xf32>, vector<32x32xf32>, vector<32x32xf32> -> vector<32x32xf32>
    %c0_6 = arith.constant 0 : index
    %c0_7 = arith.constant 0 : index
    %10 = vector.load %arg5[%c0_6, %c0_7] : memref<1x32xf32, #tpu.memory_space<vmem>>, vector<1x32xf32>
    %11 = vector.broadcast %10 : vector<1x32xf32> to vector<32x32xf32>
    %12 = arith.addf %9, %11 : vector<32x32xf32>
    %13 = math.tanh %12 : vector<32x32xf32>
    %c0_8 = arith.constant 0 : index
    %c0_9 = arith.constant 0 : index
    %14 = vector.load %arg2[%c0_8, %c0_9] : memref<2x32xf32, #tpu.memory_space<vmem>>, vector<2x32xf32>
    %cst_10 = arith.constant dense<0.000000e+00> : vector<2x32xf32>
    %15 = tpu.matmul %14, %13, %cst_10 {dimension_numbers = #tpu.dot_dimension_numbers<[1], [0], [0], [1], [0, 0, 1, 1], [], []>} : vector<2x32xf32>, vector<32x32xf32>, vector<2x32xf32> -> vector<2x32xf32>
    %cst_11 = arith.constant dense<0.000000e+00> : vector<2xf32>
    %16 = vector.multi_reduction <add>, %14, %cst_11 [1] : vector<2x32xf32> to vector<2xf32>
    %17 = vector.shape_cast %16 : vector<2xf32> to vector<2x1xf32>
    %cst_12 = arith.constant 9.99999971E-10 : f32
    %18 = vector.broadcast %cst_12 : f32 to vector<2x1xf32>
    %19 = arith.maximumf %17, %18 : vector<2x1xf32>
    %20 = vector.broadcast %19 : vector<2x1xf32> to vector<2x32xf32>
    %21 = arith.divf %15, %20 : vector<2x32xf32>
    %c0_13 = arith.constant 0 : index
    %c0_14 = arith.constant 0 : index
    %22 = vector.load %arg6[%c0_13, %c0_14] : memref<32x4xf32, #tpu.memory_space<vmem>>, vector<32x4xf32>
    %cst_15 = arith.constant dense<0.000000e+00> : vector<2x4xf32>
    %23 = tpu.matmul %21, %22, %cst_15 {dimension_numbers = #tpu.dot_dimension_numbers<[1], [0], [0], [1], [0, 0, 1, 1], [], []>} : vector<2x32xf32>, vector<32x4xf32>, vector<2x4xf32> -> vector<2x4xf32>
    %c0_16 = arith.constant 0 : index
    %c0_17 = arith.constant 0 : index
    %24 = vector.load %arg7[%c0_16, %c0_17] : memref<1x4xf32, #tpu.memory_space<vmem>>, vector<1x4xf32>
    %25 = vector.broadcast %24 : vector<1x4xf32> to vector<2x4xf32>
    %26 = arith.addf %23, %25 : vector<2x4xf32>
    %c0_18 = arith.constant 0 : index
    %c0_19 = arith.constant 0 : index
    %27 = vector.load %arg8[%c0_18, %c0_19] : memref<2x4xf32, #tpu.memory_space<vmem>>, vector<2x4xf32>
    tpu.vector_store %arg8[%c0_18, %c0_19], %26 {strides = array<i32>} : memref<2x4xf32, #tpu.memory_space<vmem>>, vector<2x4xf32>,
    return
  }
  func.func @transform_0(%arg0: i32) -> (i32, i32) {
    %c0_i32 = arith.constant 0 : i32
    %c0_i32_0 = arith.constant 0 : i32
    %c0_i32_1 = arith.constant 0 : i32
    return %c0_i32, %c0_i32_0 : i32, i32
  }
  func.func @transform_1(%arg0: i32) -> (i32, i32) {
    %c0_i32 = arith.constant 0 : i32
    %c0_i32_0 = arith.constant 0 : i32
    %c0_i32_1 = arith.constant 0 : i32
    return %c0_i32, %c0_i32_0 : i32, i32
  }
  func.func @transform_2(%arg0: i32) -> (i32, i32) {
    %c0_i32 = arith.constant 0 : i32
    %c0_i32_0 = arith.constant 0 : i32
    %c0_i32_1 = arith.constant 0 : i32
    return %c0_i32, %c0_i32_0 : i32, i32
  }
  func.func @transform_3(%arg0: i32) -> (i32, i32) {
    %c0_i32 = arith.constant 0 : i32
    %c0_i32_0 = arith.constant 0 : i32
    %c0_i32_1 = arith.constant 0 : i32
    return %c0_i32, %c0_i32_0 : i32, i32
  }
  func.func @transform_4(%arg0: i32) -> (i32, i32) {
    %c0_i32 = arith.constant 0 : i32
    %c0_i32_0 = arith.constant 0 : i32
    %c0_i32_1 = arith.constant 0 : i32
    return %c0_i32, %c0_i32_0 : i32, i32
  }
  func.func @transform_5(%arg0: i32) -> (i32, i32) {
    %c0_i32 = arith.constant 0 : i32
    %c0_i32_0 = arith.constant 0 : i32
    %c0_i32_1 = arith.constant 0 : i32
    return %c0_i32, %c0_i32_0 : i32, i32
  }
  func.func @transform_6(%arg0: i32) -> (i32, i32) {
    %c0_i32 = arith.constant 0 : i32
    %c0_i32_0 = arith.constant 0 : i32
    %c0_i32_1 = arith.constant 0 : i32
    return %c0_i32, %c0_i32_0 : i32, i32
  }
  func.func @transform_7(%arg0: i32) -> (i32, i32) {
    %c0_i32 = arith.constant 0 : i32
    %c0_i32_0 = arith.constant 0 : i32
    %c0_i32_1 = arith.constant 0 : i32
    return %c0_i32, %c0_i32_0 : i32, i32
  }
}

</mosaic_0001>

<llo_original>
// kernel: tpu_custom_call.1
$region0: #{tpu_custom_call.1}
  #allocation0 [shape = 'u32[]', space=smem, size = 0x4, offset = 0x4, fixed_abs, tag = 'smem constant byte address 0x4 - core index']
  #allocation1 [shape = 'u32[144,128]{1,0:T(1,128)}', space=vmem, size = 0x12000, scoped, tag = 'internal scratch']
  %s0 = inlined_call_operand.vmem [shape: s32[32,1], index: 0, kind: input, shape index: {}]
  %s1 = inlined_call_operand.vmem [shape: f32[2,32], index: 1, kind: input, shape index: {}]
  %s2 = inlined_call_operand.vmem [shape: f32[100,32], index: 2, kind: input, shape index: {}]
  %s3 = inlined_call_operand.vmem [shape: f32[32,32], index: 3, kind: input, shape index: {}]
  %s4 = inlined_call_operand.vmem [shape: f32[1,32], index: 4, kind: input, shape index: {}]
  %s5 = inlined_call_operand.vmem [shape: f32[32,4], index: 5, kind: input, shape index: {}]
  %s6 = inlined_call_operand.vmem [shape: f32[1,4], index: 6, kind: input, shape index: {}]
  %s7 = inlined_call_operand.hbm [shape: f32[2,4], index: 7, kind: output, shape index: {}]
  %s8 = sld [smem:[#allocation0]]
  $region38: #{tpu_custom_call.1} parent=0
    _
  %s10 = ssub.s32 1, %s8
  %s11 = scalar_select 0, %s10, %s8
  $region1: #{tpu_custom_call.1} parent=0
    #allocation2 [shape = 'u8[1024]{0}', space=vmem, size = 0x400, scoped, tag = 'output window, operand 0, single buffered']
    #allocation3 [shape = 's32[1]{0}', space=sflag, size = 0x4, scoped, tag = 'scoped memory for tpu_custom_call.1']
    %12 = vsyncpa [#allocation3], 0
    // Predicated region
    $region2: #{tpu_custom_call.1} parent=1 // pred_check
      _
    $region3: #{tpu_custom_call.1} parent=1 // pred_check_branch
      %14 = sbr.rel (0) target = $region5
    $region4: #{tpu_custom_call.1} parent=1 // pred_region
      _
    $region5: #{tpu_custom_call.1} parent=1 // pred_fallthru
      _
    // Predicated region
    $region6: #{tpu_custom_call.1} parent=1 // pred_check
      _
    $region7: #{tpu_custom_call.1} parent=1 // pred_check_branch
      %16 = sbr.rel (0) target = $region9
    $region8: #{tpu_custom_call.1} parent=1 // pred_region
      _
    $region9: #{tpu_custom_call.1} parent=1 // pred_fallthru
      _
    // Predicated region
    $region10: #{tpu_custom_call.1} parent=1 // pred_check
      _
    $region11: #{tpu_custom_call.1} parent=1 // pred_check_branch
      %18 = sbr.rel (0) target = $region13
    $region12: #{tpu_custom_call.1} parent=1 // pred_region
      _
    $region13: #{tpu_custom_call.1} parent=1 // pred_fallthru
      _
    // Predicated region
    $region14: #{tpu_custom_call.1} parent=1 // pred_check
      _
    $region15: #{tpu_custom_call.1} parent=1 // pred_check_branch
      %20 = sbr.rel (0) target = $region17
    $region16: #{tpu_custom_call.1} parent=1 // pred_region
      _
    $region17: #{tpu_custom_call.1} parent=1 // pred_fallthru
      _
    // Predicated region
    $region18: #{tpu_custom_call.1} parent=1 // pred_check
      _
    $region19: #{tpu_custom_call.1} parent=1 // pred_check_branch
      %22 = sbr.rel (0) target = $region21
    $region20: #{tpu_custom_call.1} parent=1 // pred_region
      _
    $region21: #{tpu_custom_call.1} parent=1 // pred_fallthru
      _
    // Predicated region
    $region22: #{tpu_custom_call.1} parent=1 // pred_check
      _
    $region23: #{tpu_custom_call.1} parent=1 // pred_check_branch
      %24 = sbr.rel (0) target = $region25
    $region24: #{tpu_custom_call.1} parent=1 // pred_region
      _
    $region25: #{tpu_custom_call.1} parent=1 // pred_fallthru
      _
    // Predicated region
    $region26: #{tpu_custom_call.1} parent=1 // pred_check
      _
    $region27: #{tpu_custom_call.1} parent=1 // pred_check_branch
      %26 = sbr.rel (0) target = $region29
    $region28: #{tpu_custom_call.1} parent=1 // pred_region
      _
    $region29: #{tpu_custom_call.1} parent=1 // pred_fallthru
      _
    %v27 = vlaneseq
    %v28 = vand.u32 %v27, 127
    %v29 = vld [vmem:[%s0] sm:$0xff]
    %v30 = vld [vmem:[%s0 + $0x8] sm:$0xff]
    %v31 = vld [vmem:[%s0 + $0x10] sm:$0xff]
    %v32 = vld [vmem:[%s0 + $0x18] sm:$0xff]
    %33 = vset.pattern.permute.xlu0 0
    %34 = vperm.xlu0 %33, %v29
    %v35 = vpop.permute.xlu0 %34
    %36 = vset.pattern.permute.xlu0 0
    %37 = vperm.xlu0 %36, %v30
    %v38 = vpop.permute.xlu0 %37
    %39 = vset.pattern.permute.xlu0 0
    %40 = vperm.xlu0 %39, %v31
    %v41 = vpop.permute.xlu0 %40
    %42 = vset.pattern.permute.xlu0 0
    %43 = vperm.xlu0 %42, %v32
    %v44 = vpop.permute.xlu0 %43
    %vm45 = vcmp.eq.s32.totalorder %v28, %v35
    %vm46 = vcmp.eq.s32.totalorder %v28, %v38
    %vm47 = vcmp.eq.s32.totalorder %v28, %v41
    %vm48 = vcmp.eq.s32.totalorder %v28, %v44
    %v49 = vsel %vm45, 1, 0
    %v50 = vsel %vm46, 1, 0
    %v51 = vsel %vm47, 1, 0
    %v52 = vsel %vm48, 1, 0
    %v53 = vcvt.s32.f32 %v49
    %v54 = vcvt.s32.f32 %v50
    %v55 = vcvt.s32.f32 %v51
    %v56 = vcvt.s32.f32 %v52
    %v57 = vld [vmem:[%s2] sm:$0xff]
    %v58 = vld [vmem:[%s2 + $0x8] sm:$0xff]
    %v59 = vld [vmem:[%s2 + $0x10] sm:$0xff]
    %v60 = vld [vmem:[%s2 + $0x18] sm:$0xff]
    %v61 = vld [vmem:[%s2 + $0x20] sm:$0xff]
    %v62 = vld [vmem:[%s2 + $0x28] sm:$0xff]
    %v63 = vld [vmem:[%s2 + $0x30] sm:$0xff]
    %v64 = vld [vmem:[%s2 + $0x38] sm:$0xff]
    %v65 = vld [vmem:[%s2 + $0x40] sm:$0xff]
    %v66 = vld [vmem:[%s2 + $0x48] sm:$0xff]
    %v67 = vld [vmem:[%s2 + $0x50] sm:$0xff]
    %v68 = vld [vmem:[%s2 + $0x58] sm:$0xff]
    %v69 = vld [vmem:[%s2 + $0x60] sm:$0xf]
    %vm70 = vcmask 818176
    %v72 = vsel %vm70, %v53, 0
    %v75 = vsel %vm70, %v54, 0
    %v78 = vsel %vm70, %v55, 0
    %v81 = vsel %vm70, %v56, 0
    %vm83 = vcmask 1043456
    %v85 = vsel %vm83, %v69, 0
    %87 = vmatprep.subr.mxu0 0.0
    %88 = vmatpush1.msra.mxu0 %v57
    %89 = vmatprep.subr.mxu0 0.0
    %90 = vmatpush1.msra.mxu0 %v58
    %91 = vmatprep.subr.mxu0 0.0
    %92 = vmatpush1.msra.mxu0 %v59
    %93 = vmatprep.subr.mxu0 0.0
    %94 = vmatpush1.msra.mxu0 %v60
    %95 = vmatprep.subr.mxu0 0.0
    %96 = vmatpush1.msra.mxu0 %v61
    %97 = vmatprep.subr.mxu0 0.0
    %98 = vmatpush1.msra.mxu0 %v62
    %99 = vmatprep.subr.mxu0 0.0
    %100 = vmatpush1.msra.mxu0 %v63
    %101 = vmatprep.subr.mxu0 0.0
    %102 = vmatpush1.msra.mxu0 %v64
    %103 = vmatprep.subr.mxu0 0.0
    %104 = vmatpush1.msra.mxu0 %v65
    %105 = vmatprep.subr.mxu0 0.0
    %106 = vmatpush1.msra.mxu0 %v66
    %107 = vmatprep.subr.mxu0 0.0
    %108 = vmatpush1.msra.mxu0 %v67
    %109 = vmatprep.subr.mxu0 0.0
    %110 = vmatpush1.msra.mxu0 %v68
    %111 = vmatprep.subr.mxu0 0.0
    %112 = vmatpush1.msra.mxu0 %v85
    %113 = vmatprep.subr.mxu0 0.0
    %114 = vmatpush1.msra.mxu0 0.0
    %115 = vmatprep.subr.mxu0 0.0
    %116 = vmatpush1.msra.mxu0 0.0
    %117 = vmatprep.subr.mxu0 0.0
    %118 = vmatpush1.msra.mxu0 0.0
    %119 = vmatprep.subr.mxu0 0.0
    %120 = vmatpush1.msra.mxu0 0.0
    %121 = vmatprep.subr.mxu0 0.0
    %122 = vmatpush1.msra.mxu0 0.0
    %123 = vmatprep.subr.mxu0 0.0
    %124 = vmatpush1.msra.mxu0 0.0
    %125 = vmatprep.subr.mxu0 0.0
    %126 = vmatpush1.msra.mxu0 0.0
    %127 = vmatprep.subr.mxu0 0.0
    %128 = vmatpush1.msra.mxu0 0.0
    %129 = vmatprep.subr.mxu0 0.0
    %130 = vmatpush1.msra.mxu0 0.0
    %131 = vmatprep.subr.mxu0 0.0
    %132 = vmatpush1.msra.mxu0 0.0
    %133 = vmatprep.subr.mxu0 0.0
    %134 = vmatpush1.msra.mxu0 0.0
    %135 = vmatprep.subr.mxu0 0.0
    %136 = vmatpush1.msra.mxu0 0.0
    %137 = vmatprep.subr.mxu0 0.0
    %138 = vmatpush1.msra.mxu0 0.0
    %139 = vmatprep.subr.mxu0 0.0
    %140 = vmatpush1.msra.mxu0 0.0
    %141 = vmatprep.subr.mxu0 0.0
    %142 = vmatpush1.msra.mxu0 0.0
    %143 = vmatprep.subr.mxu0 0.0
    %144 = vmatpush1.msra.mxu0 0.0
    %145 = vmatprep.subr.mxu0 0.0
    %146 = vmatpush1.msra.mxu0 0.0
    %147 = vmatprep.subr.mxu0 0.0
    %148 = vmatpush1.msra.mxu0 0.0
    %149 = vmatprep.subr.mxu0 0.0
    %150 = vmatpush1.msra.mxu0 0.0
    %151 = vmatprep.mubr.f32.mxu0 0.0
    %152 = vmatmul.mubr.f32.gmra.mrb[0].mxu0 %v72
    %v153 = vpop.f32.mrb[0].mxu0
    %v154 = vadd.f32 0.0, %v153
    %v155 = vpop.f32.mrb[0].mxu0
    %156 = vmatprep.mubr.f32.mxu0 0.0
    %157 = vmatmul.mubr.f32.gmra.mrb[0].mxu0 %v75
    %v158 = vpop.f32.mrb[0].mxu0
    %v159 = vadd.f32 0.0, %v158
    %v160 = vpop.f32.mrb[0].mxu0
    %161 = vmatprep.mubr.f32.mxu0 0.0
    %162 = vmatmul.mubr.f32.gmra.mrb[0].mxu0 %v78
    %v163 = vpop.f32.mrb[0].mxu0
    %v164 = vadd.f32 0.0, %v163
    %v165 = vpop.f32.mrb[0].mxu0
    %166 = vmatprep.mubr.f32.mxu0 0.0
    %167 = vmatmul.mubr.f32.gmra.mrb[0].mxu0 %v81
    %v168 = vpop.f32.mrb[0].mxu0
    %v169 = vadd.f32 0.0, %v168
    %v170 = vpop.f32.mrb[0].mxu0
    %171 = vdwg.mxu0
    %v172 = vld [vmem:[%s3] sm:$0xff]
    %v173 = vld [vmem:[%s3 + $0x8] sm:$0xff]
    %v174 = vld [vmem:[%s3 + $0x10] sm:$0xff]
    %v175 = vld [vmem:[%s3 + $0x18] sm:$0xff]
    %v176 = vld [vmem:[%s4] sm:$0x1]
    %v178 = vlaneseq
    %v179 = vshrl.u32 %v178, 7
    %v180 = vsub.s32 0, %v179
    %v181 = vrot.slane %v176, %v180
    %vm183 = vcmask 261120
    %v185 = vsel %vm183, %v154, 0
    %v188 = vsel %vm183, %v159, 0
    %v191 = vsel %vm183, %v164, 0
    %v194 = vsel %vm183, %v169, 0
    %196 = vmatprep.subr.mxu0 0.0
    %197 = vmatpush1.msra.mxu0 %v172
    %198 = vmatprep.subr.mxu0 0.0
    %199 = vmatpush1.msra.mxu0 %v173
    %200 = vmatprep.subr.mxu0 0.0
    %201 = vmatpush1.msra.mxu0 %v174
    %202 = vmatprep.subr.mxu0 0.0
    %203 = vmatpush1.msra.mxu0 %v175
    %204 = vmatprep.subr.mxu0 0.0
    %205 = vmatpush1.msra.mxu0 0.0
    %206 = vmatprep.subr.mxu0 0.0
    %207 = vmatpush1.msra.mxu0 0.0
    %208 = vmatprep.subr.mxu0 0.0
    %209 = vmatpush1.msra.mxu0 0.0
    %210 = vmatprep.subr.mxu0 0.0
    %211 = vmatpush1.msra.mxu0 0.0
    %212 = vmatprep.subr.mxu0 0.0
    %213 = vmatpush1.msra.mxu0 0.0
    %214 = vmatprep.subr.mxu0 0.0
    %215 = vmatpush1.msra.mxu0 0.0
    %216 = vmatprep.subr.mxu0 0.0
    %217 = vmatpush1.msra.mxu0 0.0
    %218 = vmatprep.subr.mxu0 0.0
    %219 = vmatpush1.msra.mxu0 0.0
    %220 = vmatprep.subr.mxu0 0.0
    %221 = vmatpush1.msra.mxu0 0.0
    %222 = vmatprep.subr.mxu0 0.0
    %223 = vmatpush1.msra.mxu0 0.0
    %224 = vmatprep.subr.mxu0 0.0
    %225 = vmatpush1.msra.mxu0 0.0
    %226 = vmatprep.subr.mxu0 0.0
    %227 = vmatpush1.msra.mxu0 0.0
    %228 = vmatprep.subr.mxu0 0.0
    %229 = vmatpush1.msra.mxu0 0.0
    %230 = vmatprep.subr.mxu0 0.0
    %231 = vmatpush1.msra.mxu0 0.0
    %232 = vmatprep.subr.mxu0 0.0
    %233 = vmatpush1.msra.mxu0 0.0
    %234 = vmatprep.subr.mxu0 0.0
    %235 = vmatpush1.msra.mxu0 0.0
    %236 = vmatprep.subr.mxu0 0.0
    %237 = vmatpush1.msra.mxu0 0.0
    %238 = vmatprep.subr.mxu0 0.0
    %239 = vmatpush1.msra.mxu0 0.0
    %240 = vmatprep.subr.mxu0 0.0
    %241 = vmatpush1.msra.mxu0 0.0
    %242 = vmatprep.subr.mxu0 0.0
    %243 = vmatpush1.msra.mxu0 0.0
    %244 = vmatprep.subr.mxu0 0.0
    %245 = vmatpush1.msra.mxu0 0.0
    %246 = vmatprep.subr.mxu0 0.0
    %247 = vmatpush1.msra.mxu0 0.0
    %248 = vmatprep.subr.mxu0 0.0
    %249 = vmatpush1.msra.mxu0 0.0
    %250 = vmatprep.subr.mxu0 0.0
    %251 = vmatpush1.msra.mxu0 0.0
    %252 = vmatprep.subr.mxu0 0.0
    %253 = vmatpush1.msra.mxu0 0.0
    %254 = vmatprep.subr.mxu0 0.0
    %255 = vmatpush1.msra.mxu0 0.0
    %256 = vmatprep.subr.mxu0 0.0
    %257 = vmatpush1.msra.mxu0 0.0
    %258 = vmatprep.subr.mxu0 0.0
    %259 = vmatpush1.msra.mxu0 0.0
    %260 = vmatprep.mubr.f32.mxu0 0.0
    %261 = vmatmul.mubr.f32.gmra.mrb[0].mxu0 %v185
    %v262 = vpop.f32.mrb[0].mxu0
    %v263 = vadd.f32 %v181, %v262
    %v264 = vpop.f32.mrb[0].mxu0
    %265 = vmatprep.mubr.f32.mxu0 0.0
    %266 = vmatmul.mubr.f32.gmra.mrb[0].mxu0 %v188
    %v267 = vpop.f32.mrb[0].mxu0
    %v268 = vadd.f32 %v181, %v267
    %v269 = vpop.f32.mrb[0].mxu0
    %270 = vmatprep.mubr.f32.mxu0 0.0
    %271 = vmatmul.mubr.f32.gmra.mrb[0].mxu0 %v191
    %v272 = vpop.f32.mrb[0].mxu0
    %v273 = vadd.f32 %v181, %v272
    %v274 = vpop.f32.mrb[0].mxu0
    %275 = vmatprep.mubr.f32.mxu0 0.0
    %276 = vmatmul.mubr.f32.gmra.mrb[0].mxu0 %v194
    %v277 = vpop.f32.mrb[0].mxu0
    %v278 = vadd.f32 %v181, %v277
    %v279 = vpop.f32.mrb[0].mxu0
    %280 = vdwg.mxu0
    %v281 = vtanh.pop %v263
    %v282 = vtanh.pop %v268
    %v283 = vtanh.pop %v273
    %v284 = vtanh.pop %v278
    %v285 = vld [vmem:[%s1] sm:$0x3]
    %v287 = vsel %vm183, %v285, 0
    %289 = vmatprep.subr.mxu0 0.0
    %290 = vmatpush1.msra.mxu0 %v281
    %291 = vmatprep.subr.mxu0 0.0
    %292 = vmatpush1.msra.mxu0 %v282
    %293 = vmatprep.subr.mxu0 0.0
    %294 = vmatpush1.msra.mxu0 %v283
    %295 = vmatprep.subr.mxu0 0.0
    %296 = vmatpush1.msra.mxu0 %v284
    %297 = vmatprep.subr.mxu0 0.0
    %298 = vmatpush1.msra.mxu0 0.0
    %299 = vmatprep.subr.mxu0 0.0
    %300 = vmatpush1.msra.mxu0 0.0
    %301 = vmatprep.subr.mxu0 0.0
    %302 = vmatpush1.msra.mxu0 0.0
    %303 = vmatprep.subr.mxu0 0.0
    %304 = vmatpush1.msra.mxu0 0.0
    %305 = vmatprep.subr.mxu0 0.0
    %306 = vmatpush1.msra.mxu0 0.0
    %307 = vmatprep.subr.mxu0 0.0
    %308 = vmatpush1.msra.mxu0 0.0
    %309 = vmatprep.subr.mxu0 0.0
    %310 = vmatpush1.msra.mxu0 0.0
    %311 = vmatprep.subr.mxu0 0.0
    %312 = vmatpush1.msra.mxu0 0.0
    %313 = vmatprep.subr.mxu0 0.0
    %314 = vmatpush1.msra.mxu0 0.0
    %315 = vmatprep.subr.mxu0 0.0
    %316 = vmatpush1.msra.mxu0 0.0
    %317 = vmatprep.subr.mxu0 0.0
    %318 = vmatpush1.msra.mxu0 0.0
    %319 = vmatprep.subr.mxu0 0.0
    %320 = vmatpush1.msra.mxu0 0.0
    %321 = vmatprep.subr.mxu0 0.0
    %322 = vmatpush1.msra.mxu0 0.0
    %323 = vmatprep.subr.mxu0 0.0
    %324 = vmatpush1.msra.mxu0 0.0
    %325 = vmatprep.subr.mxu0 0.0
    %326 = vmatpush1.msra.mxu0 0.0
    %327 = vmatprep.subr.mxu0 0.0
    %328 = vmatpush1.msra.mxu0 0.0
    %329 = vmatprep.subr.mxu0 0.0
    %330 = vmatpush1.msra.mxu0 0.0
    %331 = vmatprep.subr.mxu0 0.0
    %332 = vmatpush1.msra.mxu0 0.0
    %333 = vmatprep.subr.mxu0 0.0
    %334 = vmatpush1.msra.mxu0 0.0
    %335 = vmatprep.subr.mxu0 0.0
    %336 = vmatpush1.msra.mxu0 0.0
    %337 = vmatprep.subr.mxu0 0.0
    %338 = vmatpush1.msra.mxu0 0.0
    %339 = vmatprep.subr.mxu0 0.0
    %340 = vmatpush1.msra.mxu0 0.0
    %341 = vmatprep.subr.mxu0 0.0
    %342 = vmatpush1.msra.mxu0 0.0
    %343 = vmatprep.subr.mxu0 0.0
    %344 = vmatpush1.msra.mxu0 0.0
    %345 = vmatprep.subr.mxu0 0.0
    %346 = vmatpush1.msra.mxu0 0.0
    %347 = vmatprep.subr.mxu0 0.0
    %348 = vmatpush1.msra.mxu0 0.0
    %349 = vmatprep.subr.mxu0 0.0
    %350 = vmatpush1.msra.mxu0 0.0
    %351 = vmatprep.subr.mxu0 0.0
    %352 = vmatpush1.msra.mxu0 0.0
    %353 = vmatprep.mubr.f32.mxu0 0.0
    %354 = vmatmul.mubr.f32.gmra.mrb[0].mxu0 %v287
    %v355 = vpop.f32.mrb[0].mxu0
    %v356 = vadd.f32 0.0, %v355
    %v357 = vpop.f32.mrb[0].mxu0
    %358 = vdwg.mxu0
    %vm359 = vcmask 254976
    %v360 = vsel %vm359, %v285, 0.0
    %361 = vadd.xlane.f32.xlu0 %v360
    %v362 = vpop.xlane.xlu0 %361
    %v363 = vmax.f32 %v362, 1e-09
    %v364 = vrcp.pop %v363
    %v365 = vmul.f32 %v356, %v364
    %v366 = vld [vmem:[%s5] sm:$0xff]
    %v367 = vld [vmem:[%s5 + $0x8] sm:$0xff]
    %v368 = vld [vmem:[%s5 + $0x10] sm:$0xff]
    %v369 = vld [vmem:[%s5 + $0x18] sm:$0xff]
    %v370 = vld [vmem:[%s6] sm:$0x1]
    %v372 = vlaneseq
    %v373 = vshrl.u32 %v372, 7
    %v374 = vsub.s32 0, %v373
    %v375 = vrot.slane %v370, %v374
    %v378 = vsel %vm183, %v365, 0
    %380 = vmatprep.subr.mxu0 0.0
    %381 = vmatpush1.msra.mxu0 %v366
    %382 = vmatprep.subr.mxu0 0.0
    %383 = vmatpush1.msra.mxu0 %v367
    %384 = vmatprep.subr.mxu0 0.0
    %385 = vmatpush1.msra.mxu0 %v368
    %386 = vmatprep.subr.mxu0 0.0
    %387 = vmatpush1.msra.mxu0 %v369
    %388 = vmatprep.subr.mxu0 0.0
    %389 = vmatpush1.msra.mxu0 0.0
    %390 = vmatprep.subr.mxu0 0.0
    %391 = vmatpush1.msra.mxu0 0.0
    %392 = vmatprep.subr.mxu0 0.0
    %393 = vmatpush1.msra.mxu0 0.0
    %394 = vmatprep.subr.mxu0 0.0
    %395 = vmatpush1.msra.mxu0 0.0
    %396 = vmatprep.subr.mxu0 0.0
    %397 = vmatpush1.msra.mxu0 0.0
    %398 = vmatprep.subr.mxu0 0.0
    %399 = vmatpush1.msra.mxu0 0.0
    %400 = vmatprep.subr.mxu0 0.0
    %401 = vmatpush1.msra.mxu0 0.0
    %402 = vmatprep.subr.mxu0 0.0
    %403 = vmatpush1.msra.mxu0 0.0
    %404 = vmatprep.subr.mxu0 0.0
    %405 = vmatpush1.msra.mxu0 0.0
    %406 = vmatprep.subr.mxu0 0.0
    %407 = vmatpush1.msra.mxu0 0.0
    %408 = vmatprep.subr.mxu0 0.0
    %409 = vmatpush1.msra.mxu0 0.0
    %410 = vmatprep.subr.mxu0 0.0
    %411 = vmatpush1.msra.mxu0 0.0
    %412 = vmatprep.subr.mxu0 0.0
    %413 = vmatpush1.msra.mxu0 0.0
    %414 = vmatprep.subr.mxu0 0.0
    %415 = vmatpush1.msra.mxu0 0.0
    %416 = vmatprep.subr.mxu0 0.0
    %417 = vmatpush1.msra.mxu0 0.0
    %418 = vmatprep.subr.mxu0 0.0
    %419 = vmatpush1.msra.mxu0 0.0
    %420 = vmatprep.subr.mxu0 0.0
    %421 = vmatpush1.msra.mxu0 0.0
    %422 = vmatprep.subr.mxu0 0.0
    %423 = vmatpush1.msra.mxu0 0.0
    %424 = vmatprep.subr.mxu0 0.0
    %425 = vmatpush1.msra.mxu0 0.0
    %426 = vmatprep.subr.mxu0 0.0
    %427 = vmatpush1.msra.mxu0 0.0
    %428 = vmatprep.subr.mxu0 0.0
    %429 = vmatpush1.msra.mxu0 0.0
    %430 = vmatprep.subr.mxu0 0.0
    %431 = vmatpush1.msra.mxu0 0.0
    %432 = vmatprep.subr.mxu0 0.0
    %433 = vmatpush1.msra.mxu0 0.0
    %434 = vmatprep.subr.mxu0 0.0
    %435 = vmatpush1.msra.mxu0 0.0
    %436 = vmatprep.subr.mxu0 0.0
    %437 = vmatpush1.msra.mxu0 0.0
    %438 = vmatprep.subr.mxu0 0.0
    %439 = vmatpush1.msra.mxu0 0.0
    %440 = vmatprep.subr.mxu0 0.0
    %441 = vmatpush1.msra.mxu0 0.0
    %442 = vmatprep.subr.mxu0 0.0
    %443 = vmatpush1.msra.mxu0 0.0
    %444 = vmatprep.mubr.f32.mxu0 0.0
    %445 = vmatmul.mubr.f32.gmra.mrb[0].mxu0 %v378
    %v446 = vpop.f32.mrb[0].mxu0
    %v447 = vadd.f32 %v375, %v446
    %v448 = vpop.f32.mrb[0].mxu0
    %449 = vdwg.mxu0
    %vm450 = vcmask 25600
    %451 = vst.msk [vmem:[#allocation2] sm:$0x3] %vm450, %v447
    // Predicated region
    $region30: #{tpu_custom_call.1} parent=1 // pred_check
      _
    $region31: #{tpu_custom_call.1} parent=1 // pred_check_branch
      %453 = sbr.rel (0) target = $region33
    $region32: #{tpu_custom_call.1} parent=1 // pred_region
      %s455 = ssub.s32 32, 32
      %456 = vsyncadd [#allocation3], %s455
      %s458 = sshll.u32 [#allocation2], 4
      %s459 = int_to_ptr.vmem [resolvable:$true] %s458
      %461 = dma.vmem_to_hbm [thread:$0]  %s459, 32, %s7, [#allocation3]
    $region33: #{tpu_custom_call.1} parent=1 // pred_fallthru
      _
    // Predicated region
    $region34: #{tpu_custom_call.1} parent=1 // pred_check
      _
    $region35: #{tpu_custom_call.1} parent=1 // pred_check_branch
      %463 = sbr.rel (0) target = $region37
    $region36: #{tpu_custom_call.1} parent=1 // pred_region
      %464 = dma.done [#allocation3], 32
    $region37: #{tpu_custom_call.1} parent=1 // pred_fallthru
      _
    %465 = vsyncpa [#allocation3], 1

</llo_original>
